<compile_context>
chip_gen: v7x
topology: tpu7x:2x2x1
jax: 0.10.0
libtpu: 0.0.40
codegen_flags: <defaults>
</compile_context>

<pallas_src>
import math

import jax
import jax.numpy as jnp
from jax.experimental import pallas as pl
from jax.experimental.pallas import tpu as pltpu


_LANE = 128
# ~2 MiB per x block: measured elementwise-add data shows ~85% of HBM roofline
# at ~1-4 MiB blocks; 5x that (double-buffered x/out + pe) fits the scoped
# VMEM default on v5e/v6e/v7x without raising limits aggressively.
_TARGET_X_BLOCK_BYTES = 2 << 20


def _pe_add_kernel(x_ref, pe_ref, o_ref):
    # x_ref / o_ref: (B, TILE); pe_ref: (1, TILE), broadcast over the batch dim.
    o_ref[...] = (x_ref[...] + pe_ref[...]).astype(o_ref.dtype)


def make_positional_encoding(seq_len: int, d_model: int) -> jnp.ndarray:
    """Deterministic PE table, identical math to the PyTorch __init__."""
    position = jnp.arange(seq_len, dtype=jnp.float32)[:, None]            # (S, 1)
    div_term = jnp.exp(
        jnp.arange(0, d_model, 2, dtype=jnp.float32)
        * (-math.log(10000.0) / d_model)
    )                                                                      # (D/2,)
    pe = jnp.zeros((seq_len, d_model), dtype=jnp.float32)
    pe = pe.at[:, 0::2].set(jnp.sin(position * div_term))
    pe = pe.at[:, 1::2].set(jnp.cos(position * div_term))
    return pe                                                              # (S, D)


def _pick_tile(flat_len: int, batch: int, elem_bytes: int) -> int:
    """Lane-dense tile size along the flattened S*D axis."""
    tile = _TARGET_X_BLOCK_BYTES // max(1, batch * elem_bytes)
    tile = max(_LANE, (tile // _LANE) * _LANE)        # multiple of 128 lanes
    if flat_len <= tile:
        return flat_len                               # single full block
    return tile


def positional_encoding_forward(x, pe_full, *, tile=None, donate_x=False):
    """x: (B, S, D); pe_full: (max_seq_len, D) float32. Returns x + pe[:S]."""
    B, S, D = x.shape
    max_S, D_pe = pe_full.shape
    assert D_pe == D and max_S >= S

    F = S * D
    if tile is None:
        tile = _pick_tile(F, B, x.dtype.itemsize)

    # Lane-dense flattened views (free reshapes for contiguous row-major data).
    x2 = x.reshape(B, F)
    if tile == F and (F % _LANE != 0) and (max_S * D != F):
        # Rare fallback: a single (1, F) block must span the full pe extent to
        # satisfy the (8,128)/full-dim block rule; slice only pe (small).
        pe2 = pe_full[:S, :].reshape(1, F)
    else:
        pe2 = pe_full.reshape(1, max_S * D)

    grid = (pl.cdiv(F, tile),)

    out = pl.pallas_call(
        _pe_add_kernel,
        out_shape=jax.ShapeDtypeStruct((B, F), x.dtype),
        grid_spec=pltpu.PrefetchScalarGridSpec(
            num_scalar_prefetch=0,
            grid=grid,
            in_specs=[
                pl.BlockSpec((B, tile), lambda t: (0, t)),   # x slab
                pl.BlockSpec((1, tile), lambda t: (0, t)),   # pe slab (bcast)
            ],
            out_specs=pl.BlockSpec((B, tile), lambda t: (0, t)),
        ),
        compiler_params=pltpu.CompilerParams(
            dimension_semantics=("parallel",),   # shards tiles over v7x's 2 TCs
            vmem_limit_bytes=32 * 1024 * 1024,
        ),
        input_output_aliases=({0: 0} if donate_x else {}),
    )(x2, pe2)

    return out.reshape(B, S, D)


if __name__ == "__main__":
    key = jax.random.PRNGKey(0)

    # Primary check: small shapes consistent with the module.
    B, S, D = 2, 8, 32
    max_seq_len = 16                      # pe buffer longer than actual sequence
    x = jax.random.normal(key, (B, S, D), dtype=jnp.float32)
    pe_full = make_positional_encoding(max_seq_len, D)

    ref = x + pe_full[None, :S, :]        # eval-mode dropout == identity
    out = jax.block_until_ready(positional_encoding_forward(x, pe_full))
    assert out.shape == (B, S, D)
    assert jnp.allclose(out, ref, atol=1e-6), "mismatch vs reference (single tile)"

    # Secondary check: force a small tile to exercise the multi-tile grid path.
    B2, S2, D2 = 2, 40, 32                # S*D = 1280 -> 10 tiles of 128 lanes
    x_b = jax.random.normal(jax.random.PRNGKey(1), (B2, S2, D2), dtype=jnp.float32)
    pe_full_b = make_positional_encoding(64, D2)
    ref_b = x_b + pe_full_b[None, :S2, :]
    out_b = jax.block_until_ready(
        positional_encoding_forward(x_b, pe_full_b, tile=128))
    assert jnp.allclose(out_b, ref_b, atol=1e-6), "mismatch vs reference (tiled)"

    print("KERNEL_OK")
</pallas_src>

<mosaic_0001>
module attributes {stable_mosaic.version = 11 : i64} {
  func.func @_pe_add_kernel(%arg0: i32, %arg1: memref<2x256xf32, #tpu.memory_space<vmem>>, %arg2: memref<1x256xf32, #tpu.memory_space<vmem>>, %arg3: memref<2x256xf32, #tpu.memory_space<vmem>>) attributes {dimension_semantics = [#tpu.dimension_semantics<parallel>], iteration_bounds = array<i64: 1>, scalar_prefetch = 0 : i64, scratch_operands = 0 : i64, tpu.core_type = #tpu.core_type<tc>, window_params = [{transform_indices = @transform_0, window_bounds = array<i64: 2, 256>}, {transform_indices = @transform_1, window_bounds = array<i64: 1, 256>}, {transform_indices = @transform_2, window_bounds = array<i64: 2, 256>}]} {
    %c0 = arith.constant 0 : index
    %c0_0 = arith.constant 0 : index
    %0 = vector.load %arg1[%c0, %c0_0] : memref<2x256xf32, #tpu.memory_space<vmem>>, vector<2x256xf32>
    %c0_1 = arith.constant 0 : index
    %c0_2 = arith.constant 0 : index
    %1 = vector.load %arg2[%c0_1, %c0_2] : memref<1x256xf32, #tpu.memory_space<vmem>>, vector<1x256xf32>
    %2 = vector.broadcast %1 : vector<1x256xf32> to vector<2x256xf32>
    %3 = arith.addf %0, %2 : vector<2x256xf32>
    %c0_3 = arith.constant 0 : index
    %c0_4 = arith.constant 0 : index
    %4 = vector.load %arg3[%c0_3, %c0_4] : memref<2x256xf32, #tpu.memory_space<vmem>>, vector<2x256xf32>
    tpu.vector_store %arg3[%c0_3, %c0_4], %3 {strides = array<i32>} : memref<2x256xf32, #tpu.memory_space<vmem>>, vector<2x256xf32>,
    return
  }
  func.func @transform_0(%arg0: i32) -> (i32, i32) {
    %c0_i32 = arith.constant 0 : i32
    %c0_i32_0 = arith.constant 0 : i32
    return %c0_i32, %arg0 : i32, i32
  }
  func.func @transform_1(%arg0: i32) -> (i32, i32) {
    %c0_i32 = arith.constant 0 : i32
    %c0_i32_0 = arith.constant 0 : i32
    return %c0_i32, %arg0 : i32, i32
  }
  func.func @transform_2(%arg0: i32) -> (i32, i32) {
    %c0_i32 = arith.constant 0 : i32
    %c0_i32_0 = arith.constant 0 : i32
    return %c0_i32, %arg0 : i32, i32
  }
}

</mosaic_0001>

<llo_original>
// kernel: tpu_custom_call.1
$region0: #{tpu_custom_call.1}
  #allocation0 [shape = 'u32[]', space=smem, size = 0x4, offset = 0x4, fixed_abs, tag = 'smem constant byte address 0x4 - core index']
  #allocation1 [shape = 'u32[144,128]{1,0:T(1,128)}', space=vmem, size = 0x12000, scoped, tag = 'internal scratch']
  %s0 = inlined_call_operand.hbm [shape: f32[2,256], index: 0, kind: input, shape index: {}]
  %s1 = inlined_call_operand.hbm [shape: f32[1,512], index: 1, kind: input, shape index: {}]
  %s2 = inlined_call_operand.hbm [shape: f32[2,256], index: 2, kind: output, shape index: {}]
  %s3 = sld [smem:[#allocation0]]
  $region26: #{tpu_custom_call.1} parent=0
    _
  %s5 = ssub.s32 1, %s3
  %s6 = scalar_select 0, %s5, %s3
  $region1: #{tpu_custom_call.1} parent=0
    #allocation2 [shape = 'u8[2048]{0}', space=vmem, size = 0x800, scoped, tag = 'input window, operand 0, single buffered']
    #allocation3 [shape = 's32[1]{0}', space=sflag, size = 0x4, scoped, tag = 'scoped memory for tpu_custom_call.1']
    #allocation4 [shape = 's32[1]{0}', space=sflag, size = 0x4, scoped, tag = 'scoped memory for tpu_custom_call.1']
    #allocation5 [shape = 'u8[1024]{0}', space=vmem, size = 0x400, scoped, tag = 'input window, operand 1, single buffered']
    #allocation6 [shape = 's32[1]{0}', space=sflag, size = 0x4, scoped, tag = 'scoped memory for tpu_custom_call.1']
    #allocation7 [shape = 'u8[2048]{0}', space=vmem, size = 0x800, scoped, tag = 'output window, operand 0, single buffered']
    %7 = vsyncpa [#allocation3], 0
    %8 = vsyncpa [#allocation6], 0
    %9 = vsyncpa [#allocation4], 0
    // Predicated region
    $region2: #{tpu_custom_call.1} parent=1 // pred_check
      _
    $region3: #{tpu_custom_call.1} parent=1 // pred_check_branch
      %11 = sbr.rel (0) target = $region5
    $region4: #{tpu_custom_call.1} parent=1 // pred_region
      %s13 = ssub.s32 64, 64
      %14 = vsyncadd [#allocation3], %s13
      %s16 = sshll.u32 [#allocation2], 4
      %s17 = int_to_ptr.vmem [resolvable:$true] %s16
      %19 = dma.hbm_to_vmem [thread:$0]  %s0, 64, %s17, [#allocation3]
    $region5: #{tpu_custom_call.1} parent=1 // pred_fallthru
      _
    // Predicated region
    $region6: #{tpu_custom_call.1} parent=1 // pred_check
      _
    $region7: #{tpu_custom_call.1} parent=1 // pred_check_branch
      %21 = sbr.rel (0) target = $region9
    $region8: #{tpu_custom_call.1} parent=1 // pred_region
      %s23 = ssub.s32 32, 32
      %24 = vsyncadd [#allocation6], %s23
      %s26 = sshll.u32 [#allocation5], 4
      %s27 = int_to_ptr.vmem [resolvable:$true] %s26
      %29 = dma.hbm_to_vmem [thread:$0]  %s1, 32, %s27, [#allocation6]
    $region9: #{tpu_custom_call.1} parent=1 // pred_fallthru
      _
    // Predicated region
    $region10: #{tpu_custom_call.1} parent=1 // pred_check
      _
    $region11: #{tpu_custom_call.1} parent=1 // pred_check_branch
      %31 = sbr.rel (0) target = $region13
    $region12: #{tpu_custom_call.1} parent=1 // pred_region
      %32 = dma.done [#allocation3], 64
    $region13: #{tpu_custom_call.1} parent=1 // pred_fallthru
      _
    // Predicated region
    $region14: #{tpu_custom_call.1} parent=1 // pred_check
      _
    $region15: #{tpu_custom_call.1} parent=1 // pred_check_branch
      %34 = sbr.rel (0) target = $region17
    $region16: #{tpu_custom_call.1} parent=1 // pred_region
      %35 = dma.done [#allocation6], 32
    $region17: #{tpu_custom_call.1} parent=1 // pred_fallthru
      _
    %v36 = vld [vmem:[#allocation2] sm:$0xf]
    %v37 = vld [vmem:[#allocation5] sm:$0x3]
    %v39 = vlaneseq
    %v40 = vshrl.u32 %v39, 7
    %v41 = vsub.s32 0, %v40
    %v42 = vrot.slane %v37, %v41
    %v43 = vlaneseq
    %v44 = vshrl.u32 %v43, 7
    %v45 = vsub.s32 1, %v44
    %v46 = vrot.slane %v37, %v45
    %v47 = vcombine.low %v42, %v46
    %v49 = vunpack.c.l.s4 1983009808
    %v50 = vunpack.c.0.s8 %v49
    %v51 = vlaneseq
    %v52 = vshrl.u32 %v51, 7
    %v53 = vsub.s32 %v50, %v52
    %v54 = vrot.slane %v47, %v53
    %v56 = vadd.f32 %v36, %v54
    %57 = vst [vmem:[#allocation7] sm:$0xf] %v56
    // Predicated region
    $region18: #{tpu_custom_call.1} parent=1 // pred_check
      _
    $region19: #{tpu_custom_call.1} parent=1 // pred_check_branch
      %59 = sbr.rel (0) target = $region21
    $region20: #{tpu_custom_call.1} parent=1 // pred_region
      %s61 = ssub.s32 64, 64
      %62 = vsyncadd [#allocation4], %s61
      %s64 = sshll.u32 [#allocation7], 4
      %s65 = int_to_ptr.vmem [resolvable:$true] %s64
      %67 = dma.vmem_to_hbm [thread:$0]  %s65, 64, %s2, [#allocation4]
    $region21: #{tpu_custom_call.1} parent=1 // pred_fallthru
      _
    // Predicated region
    $region22: #{tpu_custom_call.1} parent=1 // pred_check
      _
    $region23: #{tpu_custom_call.1} parent=1 // pred_check_branch
      %69 = sbr.rel (0) target = $region25
    $region24: #{tpu_custom_call.1} parent=1 // pred_region
      %70 = dma.done [#allocation4], 64
    $region25: #{tpu_custom_call.1} parent=1 // pred_fallthru
      _
    %71 = vsyncpa [#allocation3], 1
    %72 = vsyncpa [#allocation6], 1
    %73 = vsyncpa [#allocation4], 1

</llo_original>
